<compile_context>
chip_gen: v7x
topology: tpu7x:2x2x1
jax: 0.10.0
libtpu: 0.0.40
codegen_flags: <defaults>
</compile_context>

<pallas_src>
import jax
import jax.numpy as jnp
from jax.experimental import pallas as pl
from jax.experimental.pallas import tpu as pltpu


def _round_up(x, m):
    return ((x + m - 1) // m) * m


def _segment_sum_kernel(seg_ref, edges_ref, out_ref, acc_ref):
    """seg_ref:   [1, TE]  int32 per-edge graph id (out-of-range id => padding)
       edges_ref: [TE, Dp] float per-edge features (lane-dense, zero padded)
       out_ref:   [TG, Dp] float per-graph aggregated features
       acc_ref:   [TG, Dp] f32   VMEM accumulator, lives across the E grid axis
    """
    e_step = pl.program_id(1)

    @pl.when(e_step == 0)
    def _init():
        acc_ref[...] = jnp.zeros_like(acc_ref)

    edges = edges_ref[...]                                   # [TE, Dp]
    seg = seg_ref[...]                                       # [1, TE]
    tg = acc_ref.shape[0]
    te = edges.shape[0]
    g_base = pl.program_id(0) * tg
    gid = jax.lax.broadcasted_iota(jnp.int32, (tg, te), 0) + g_base
    # One-hot membership in the edge dtype (0/1 exact in bf16; no f32 upcast).
    onehot = (gid == seg).astype(edges.dtype)                # [TG, TE]
    # MXU matmul, f32 accumulation across all E tiles.
    acc_ref[...] += jnp.dot(onehot, edges,
                            preferred_element_type=jnp.float32)

    @pl.when(e_step == pl.num_programs(1) - 1)
    def _finalize():
        out_ref[...] = acc_ref[...].astype(out_ref.dtype)


def edges_to_globals_aggregator(edges, n_edge, num_graphs,
                                *, max_edge_tile=2048, max_graph_tile=256,
                                edge_tile_bytes=8 * 1024 * 1024):
    """Pallas equivalent of EdgesToGlobalsAggregator(reducer=scatter_add).

    edges:      [num_edges, edge_dim] float
    n_edge:     [num_graphs] int32, edges per graph (sum(n_edge) == num_edges)
    num_graphs: python int
    returns:    [num_graphs, edge_dim]
    """
    num_edges, edge_dim = edges.shape
    dtype = edges.dtype

    # --- lane/sublane-dense padded shapes -----------------------------------
    d_pad = _round_up(edge_dim, 128)                 # lanes
    g_pad8 = _round_up(max(num_graphs, 1), 8)        # sublanes
    tg = min(g_pad8, max_graph_tile)
    g_pad = _round_up(max(num_graphs, 1), tg)

    e_pad8 = _round_up(max(num_edges, 1), 8)
    # Biggest E tile whose double-buffered footprint fits the budget
    # (kept small enough for v7x's 64 MiB physical / 32 MiB scoped VMEM).
    itemsize = jnp.dtype(dtype).itemsize
    te = edge_tile_bytes // (2 * d_pad * itemsize)
    te = max(128, min(max_edge_tile, (te // 128) * 128))
    if e_pad8 <= te:
        te = e_pad8                                  # single E block == full axis
    e_pad = _round_up(max(num_edges, 1), te)

    # --- per-edge graph ids (torch.repeat_interleave equivalent) ------------
    csum = jnp.cumsum(n_edge.astype(jnp.int32))
    total = csum[-1] if num_graphs > 0 else jnp.int32(0)
    pos = jnp.arange(e_pad, dtype=jnp.int32)
    seg = jnp.searchsorted(csum, pos, side='right').astype(jnp.int32)
    # Padded / surplus edges get an id that never matches any graph row.
    seg = jnp.where(pos < total, seg, jnp.int32(g_pad))
    seg = seg.reshape(1, e_pad)

    edges_p = jnp.pad(edges, ((0, e_pad - num_edges), (0, d_pad - edge_dim)))

    grid = (g_pad // tg, e_pad // te)

    out_p = pl.pallas_call(
        _segment_sum_kernel,
        out_shape=jax.ShapeDtypeStruct((g_pad, d_pad), dtype),
        grid_spec=pltpu.PrefetchScalarGridSpec(
            num_scalar_prefetch=0,
            grid=grid,
            in_specs=[
                pl.BlockSpec((1, te), lambda g, e: (0, e)),       # seg ids
                pl.BlockSpec((te, d_pad), lambda g, e: (e, 0)),   # edge tile
            ],
            out_specs=pl.BlockSpec((tg, d_pad), lambda g, e: (g, 0)),
            scratch_shapes=[pltpu.VMEM((tg, d_pad), jnp.float32)],
        ),
        compiler_params=pltpu.CompilerParams(
            # G tiles are independent (megacore-parallel on v7x); the E axis
            # is the pipelined reduction and stays "arbitrary" and last.
            dimension_semantics=("parallel", "arbitrary"),
            vmem_limit_bytes=32 * 1024 * 1024,
        ),
    )(seg, edges_p)

    return out_p[:num_graphs, :edge_dim]


if __name__ == "__main__":
    key = jax.random.PRNGKey(0)

    # Small synthetic graph batch: 2 graphs, 8 edges total, edge_dim = 32.
    num_graphs = 2
    n_edge = jnp.array([5, 3], dtype=jnp.int32)
    num_edges = 8
    edge_dim = 32

    edges = jax.random.normal(key, (num_edges, edge_dim), dtype=jnp.float32)

    out = edges_to_globals_aggregator(edges, n_edge, num_graphs)
    out = jax.block_until_ready(out)

    # Reference (pure JAX) check of the forward semantics.
    indices = jnp.repeat(jnp.arange(num_graphs, dtype=jnp.int32), n_edge,
                         total_repeat_length=num_edges)
    ref = jax.ops.segment_sum(edges, indices, num_segments=num_graphs)
    assert out.shape == (num_graphs, edge_dim)
    assert jnp.allclose(out, ref, atol=1e-5, rtol=1e-5)

    print("KERNEL_OK")
</pallas_src>

<mosaic_0001>
module attributes {stable_mosaic.version = 11 : i64} {
  func.func @_segment_sum_kernel(%arg0: i32, %arg1: i32, %arg2: memref<1x8xi32, #tpu.memory_space<vmem>>, %arg3: memref<8x128xf32, #tpu.memory_space<vmem>>, %arg4: memref<8x128xf32, #tpu.memory_space<vmem>>, %arg5: memref<8x128xf32, #tpu.memory_space<vmem>>) attributes {dimension_semantics = [#tpu.dimension_semantics<parallel>, #tpu.dimension_semantics<arbitrary>], iteration_bounds = array<i64: 1, 1>, scalar_prefetch = 0 : i64, scratch_operands = 1 : i64, tpu.core_type = #tpu.core_type<tc>, window_params = [{transform_indices = @transform_0, window_bounds = array<i64: 1, 8>}, {transform_indices = @transform_1, window_bounds = array<i64: 8, 128>}, {transform_indices = @transform_2, window_bounds = array<i64: 8, 128>}]} {
    %c0_i32 = arith.constant 0 : i32
    %0 = arith.cmpi eq, %arg1, %c0_i32 : i32
    %1 = arith.extui %0 : i1 to i32
    %c0_i32_0 = arith.constant 0 : i32
    %2 = arith.cmpi ne, %1, %c0_i32_0 : i32
    scf.if %2 {
      %cst_10 = arith.constant 0.000000e+00 : f32
      %20 = vector.broadcast %cst_10 : f32 to vector<8x128xf32>
      %c0_11 = arith.constant 0 : index
      %c0_12 = arith.constant 0 : index
      %21 = vector.load %arg5[%c0_11, %c0_12] : memref<8x128xf32, #tpu.memory_space<vmem>>, vector<8x128xf32>
      tpu.vector_store %arg5[%c0_11, %c0_12], %20 {strides = array<i32>} : memref<8x128xf32, #tpu.memory_space<vmem>>, vector<8x128xf32>,
    } else {
    }
    %c0 = arith.constant 0 : index
    %c0_1 = arith.constant 0 : index
    %3 = vector.load %arg3[%c0, %c0_1] : memref<8x128xf32, #tpu.memory_space<vmem>>, vector<8x128xf32>
    %c0_2 = arith.constant 0 : index
    %c0_3 = arith.constant 0 : index
    %4 = vector.load %arg2[%c0_2, %c0_3] : memref<1x8xi32, #tpu.memory_space<vmem>>, vector<1x8xi32>
    %c8_i32 = arith.constant 8 : i32
    %5 = arith.muli %arg0, %c8_i32 : i32
    %6 = tpu.iota {dimensions = array<i32: 0>} : vector<8x8xi32>
    %7 = vector.broadcast %5 : i32 to vector<8x8xi32>
    %8 = arith.addi %6, %7 : vector<8x8xi32>
    %9 = vector.broadcast %4 : vector<1x8xi32> to vector<8x8xi32>
    %10 = arith.cmpi eq, %8, %9 : vector<8x8xi32>
    %11 = arith.extui %10 : vector<8x8xi1> to vector<8x8xi32>
    %12 = arith.sitofp %11 : vector<8x8xi32> to vector<8x8xf32>
    %c0_4 = arith.constant 0 : index
    %c0_5 = arith.constant 0 : index
    %13 = vector.load %arg5[%c0_4, %c0_5] : memref<8x128xf32, #tpu.memory_space<vmem>>, vector<8x128xf32>
    %cst = arith.constant dense<0.000000e+00> : vector<8x128xf32>
    %14 = tpu.matmul %12, %3, %cst {dimension_numbers = #tpu.dot_dimension_numbers<[1], [0], [0], [1], [0, 0, 1, 1], [], []>} : vector<8x8xf32>, vector<8x128xf32>, vector<8x128xf32> -> vector<8x128xf32>
    %15 = arith.addf %13, %14 : vector<8x128xf32>
    %c0_6 = arith.constant 0 : index
    %c0_7 = arith.constant 0 : index
    %16 = vector.load %arg5[%c0_6, %c0_7] : memref<8x128xf32, #tpu.memory_space<vmem>>, vector<8x128xf32>
    tpu.vector_store %arg5[%c0_6, %c0_7], %15 {strides = array<i32>} : memref<8x128xf32, #tpu.memory_space<vmem>>, vector<8x128xf32>,
    %c0_i32_8 = arith.constant 0 : i32
    %17 = arith.cmpi eq, %arg1, %c0_i32_8 : i32
    %18 = arith.extui %17 : i1 to i32
    %c0_i32_9 = arith.constant 0 : i32
    %19 = arith.cmpi ne, %18, %c0_i32_9 : i32
    scf.if %19 {
      %c0_10 = arith.constant 0 : index
      %c0_11 = arith.constant 0 : index
      %20 = vector.load %arg5[%c0_10, %c0_11] : memref<8x128xf32, #tpu.memory_space<vmem>>, vector<8x128xf32>
      %c0_12 = arith.constant 0 : index
      %c0_13 = arith.constant 0 : index
      %21 = vector.load %arg4[%c0_12, %c0_13] : memref<8x128xf32, #tpu.memory_space<vmem>>, vector<8x128xf32>
      tpu.vector_store %arg4[%c0_12, %c0_13], %20 {strides = array<i32>} : memref<8x128xf32, #tpu.memory_space<vmem>>, vector<8x128xf32>,
    } else {
    }
    return
  }
  func.func @transform_0(%arg0: i32, %arg1: i32) -> (i32, i32) {
    %c0_i32 = arith.constant 0 : i32
    %c0_i32_0 = arith.constant 0 : i32
    return %c0_i32, %arg1 : i32, i32
  }
  func.func @transform_1(%arg0: i32, %arg1: i32) -> (i32, i32) {
    %c0_i32 = arith.constant 0 : i32
    %c0_i32_0 = arith.constant 0 : i32
    return %arg1, %c0_i32 : i32, i32
  }
  func.func @transform_2(%arg0: i32, %arg1: i32) -> (i32, i32) {
    %c0_i32 = arith.constant 0 : i32
    %c0_i32_0 = arith.constant 0 : i32
    return %arg0, %c0_i32 : i32, i32
  }
}

</mosaic_0001>

<llo_original>
// kernel: tpu_custom_call.1
$region0: #{tpu_custom_call.1}
  #allocation0 [shape = 'u32[]', space=smem, size = 0x4, offset = 0x4, fixed_abs, tag = 'smem constant byte address 0x4 - core index']
  #allocation1 [shape = 'u32[144,128]{1,0:T(1,128)}', space=vmem, size = 0x12000, scoped, tag = 'internal scratch']
  #allocation2 [shape = 'f32[8,128]{1,0:T(8,128)}', space=vmem, size = 0x1000, scoped, tag = 'scratch operand']
  %s0 = inlined_call_operand.hbm [shape: s32[1,8], index: 0, kind: input, shape index: {}]
  %s1 = inlined_call_operand.hbm [shape: f32[8,128], index: 1, kind: input, shape index: {}]
  %s2 = inlined_call_operand.hbm [shape: f32[8,128], index: 2, kind: output, shape index: {}]
  %s3 = sld [smem:[#allocation0]]
  $region34: #{tpu_custom_call.1} parent=0
    _
  %s5 = ssub.s32 1, %s3
  %s6 = scalar_select 0, %s5, %s3
  $region1: #{tpu_custom_call.1} parent=0
    #allocation3 [shape = 'u8[512]{0}', space=vmem, size = 0x400, scoped, tag = 'input window, operand 0, single buffered']
    #allocation4 [shape = 's32[1]{0}', space=sflag, size = 0x4, scoped, tag = 'scoped memory for tpu_custom_call.1']
    #allocation5 [shape = 's32[1]{0}', space=sflag, size = 0x4, scoped, tag = 'scoped memory for tpu_custom_call.1']
    #allocation6 [shape = 'u8[4096]{0}', space=vmem, size = 0x1000, scoped, tag = 'input window, operand 1, single buffered']
    #allocation7 [shape = 's32[1]{0}', space=sflag, size = 0x4, scoped, tag = 'scoped memory for tpu_custom_call.1']
    #allocation8 [shape = 'u8[4096]{0}', space=vmem, size = 0x1000, scoped, tag = 'output window, operand 0, single buffered']
    %7 = vsyncpa [#allocation4], 0
    %8 = vsyncpa [#allocation7], 0
    %9 = vsyncpa [#allocation5], 0
    // Predicated region
    $region2: #{tpu_custom_call.1} parent=1 // pred_check
      _
    $region3: #{tpu_custom_call.1} parent=1 // pred_check_branch
      %11 = sbr.rel (0) target = $region5
    $region4: #{tpu_custom_call.1} parent=1 // pred_region
      %s13 = ssub.s32 16, 16
      %14 = vsyncadd [#allocation4], %s13
      %s16 = sshll.u32 [#allocation3], 4
      %s17 = int_to_ptr.vmem [resolvable:$true] %s16
      %19 = dma.hbm_to_vmem [thread:$0]  %s0, 16, %s17, [#allocation4]
    $region5: #{tpu_custom_call.1} parent=1 // pred_fallthru
      _
    // Predicated region
    $region6: #{tpu_custom_call.1} parent=1 // pred_check
      _
    $region7: #{tpu_custom_call.1} parent=1 // pred_check_branch
      %21 = sbr.rel (0) target = $region9
    $region8: #{tpu_custom_call.1} parent=1 // pred_region
      %s23 = ssub.s32 128, 128
      %24 = vsyncadd [#allocation7], %s23
      %s26 = sshll.u32 [#allocation6], 4
      %s27 = int_to_ptr.vmem [resolvable:$true] %s26
      %29 = dma.hbm_to_vmem [thread:$0]  %s1, 128, %s27, [#allocation7]
    $region9: #{tpu_custom_call.1} parent=1 // pred_fallthru
      _
    // Predicated region
    $region10: #{tpu_custom_call.1} parent=1 // pred_check
      _
    $region11: #{tpu_custom_call.1} parent=1 // pred_check_branch
      %31 = sbr.rel (0) target = $region13
    $region12: #{tpu_custom_call.1} parent=1 // pred_region
      %32 = dma.done [#allocation4], 16
    $region13: #{tpu_custom_call.1} parent=1 // pred_fallthru
      _
    // Predicated region
    $region14: #{tpu_custom_call.1} parent=1 // pred_check
      _
    $region15: #{tpu_custom_call.1} parent=1 // pred_check_branch
      %34 = sbr.rel (0) target = $region17
    $region16: #{tpu_custom_call.1} parent=1 // pred_region
      %35 = dma.done [#allocation7], 128
    $region17: #{tpu_custom_call.1} parent=1 // pred_fallthru
      _
    %p36 = scmp.eq.s32.totalorder 0, 0
    // Predicated region
    $region18: #{tpu_custom_call.1} parent=1 // pred_check
      %p37 = pneg %p36
    $region19: #{tpu_custom_call.1} parent=1 // pred_check_branch
      %39 = sbr.rel (%p37) target = $region21
    $region20: #{tpu_custom_call.1} parent=1 // pred_region
      %40 = vst [vmem:[#allocation2] sm:$0xff] 0.0
    $region21: #{tpu_custom_call.1} parent=1 // pred_fallthru
      _
    %v41 = vld [vmem:[#allocation6] sm:$0xff]
    %v42 = vld [vmem:[#allocation3] sm:$0x1]
    %s43 = smul.u32 0, 8
    %v44 = vlaneseq
    %v45 = vshrl.u32 %v44, 7
    %v46 = vstv %s43
    %v47 = vadd.s32 %v45, %v46
    %v48 = vlaneseq
    %v49 = vshrl.u32 %v48, 7
    %v50 = vsub.s32 0, %v49
    %v51 = vrot.slane %v42, %v50
    %vm52 = vcmp.eq.s32.totalorder %v47, %v51
    %v53 = vsel %vm52, 1, 0
    %v54 = vcvt.s32.f32 %v53
    %v55 = vld [vmem:[#allocation2] sm:$0xff]
    %vm56 = vcmask 64512
    %v58 = vsel %vm56, %v54, 0
    %60 = vmatprep.subr.mxu0 0.0
    %61 = vmatpush1.msra.mxu0 %v41
    %62 = vmatprep.subr.mxu0 0.0
    %63 = vmatpush1.msra.mxu0 0.0
    %64 = vmatprep.subr.mxu0 0.0
    %65 = vmatpush1.msra.mxu0 0.0
    %66 = vmatprep.subr.mxu0 0.0
    %67 = vmatpush1.msra.mxu0 0.0
    %68 = vmatprep.subr.mxu0 0.0
    %69 = vmatpush1.msra.mxu0 0.0
    %70 = vmatprep.subr.mxu0 0.0
    %71 = vmatpush1.msra.mxu0 0.0
    %72 = vmatprep.subr.mxu0 0.0
    %73 = vmatpush1.msra.mxu0 0.0
    %74 = vmatprep.subr.mxu0 0.0
    %75 = vmatpush1.msra.mxu0 0.0
    %76 = vmatprep.subr.mxu0 0.0
    %77 = vmatpush1.msra.mxu0 0.0
    %78 = vmatprep.subr.mxu0 0.0
    %79 = vmatpush1.msra.mxu0 0.0
    %80 = vmatprep.subr.mxu0 0.0
    %81 = vmatpush1.msra.mxu0 0.0
    %82 = vmatprep.subr.mxu0 0.0
    %83 = vmatpush1.msra.mxu0 0.0
    %84 = vmatprep.subr.mxu0 0.0
    %85 = vmatpush1.msra.mxu0 0.0
    %86 = vmatprep.subr.mxu0 0.0
    %87 = vmatpush1.msra.mxu0 0.0
    %88 = vmatprep.subr.mxu0 0.0
    %89 = vmatpush1.msra.mxu0 0.0
    %90 = vmatprep.subr.mxu0 0.0
    %91 = vmatpush1.msra.mxu0 0.0
    %92 = vmatprep.subr.mxu0 0.0
    %93 = vmatpush1.msra.mxu0 0.0
    %94 = vmatprep.subr.mxu0 0.0
    %95 = vmatpush1.msra.mxu0 0.0
    %96 = vmatprep.subr.mxu0 0.0
    %97 = vmatpush1.msra.mxu0 0.0
    %98 = vmatprep.subr.mxu0 0.0
    %99 = vmatpush1.msra.mxu0 0.0
    %100 = vmatprep.subr.mxu0 0.0
    %101 = vmatpush1.msra.mxu0 0.0
    %102 = vmatprep.subr.mxu0 0.0
    %103 = vmatpush1.msra.mxu0 0.0
    %104 = vmatprep.subr.mxu0 0.0
    %105 = vmatpush1.msra.mxu0 0.0
    %106 = vmatprep.subr.mxu0 0.0
    %107 = vmatpush1.msra.mxu0 0.0
    %108 = vmatprep.subr.mxu0 0.0
    %109 = vmatpush1.msra.mxu0 0.0
    %110 = vmatprep.subr.mxu0 0.0
    %111 = vmatpush1.msra.mxu0 0.0
    %112 = vmatprep.subr.mxu0 0.0
    %113 = vmatpush1.msra.mxu0 0.0
    %114 = vmatprep.subr.mxu0 0.0
    %115 = vmatpush1.msra.mxu0 0.0
    %116 = vmatprep.subr.mxu0 0.0
    %117 = vmatpush1.msra.mxu0 0.0
    %118 = vmatprep.subr.mxu0 0.0
    %119 = vmatpush1.msra.mxu0 0.0
    %120 = vmatprep.subr.mxu0 0.0
    %121 = vmatpush1.msra.mxu0 0.0
    %122 = vmatprep.subr.mxu0 0.0
    %123 = vmatpush1.msra.mxu0 0.0
    %124 = vmatprep.mubr.f32.mxu0 0.0
    %125 = vmatmul.mubr.f32.gmra.mrb[0].mxu0 %v58
    %v126 = vpop.f32.mrb[0].mxu0
    %v127 = vadd.f32 0.0, %v126
    %v128 = vpop.f32.mrb[0].mxu0
    %129 = vdwg.mxu0
    %v130 = vadd.f32 %v55, %v127
    %131 = vst [vmem:[#allocation2] sm:$0xff] %v130
    // Predicated region
    $region22: #{tpu_custom_call.1} parent=1 // pred_check
      %p132 = pneg %p36
    $region23: #{tpu_custom_call.1} parent=1 // pred_check_branch
      %134 = sbr.rel (%p132) target = $region25
    $region24: #{tpu_custom_call.1} parent=1 // pred_region
      %v135 = vld [vmem:[#allocation2] sm:$0xff]
      %136 = vst [vmem:[#allocation8] sm:$0xff] %v135
    $region25: #{tpu_custom_call.1} parent=1 // pred_fallthru
      _
    // Predicated region
    $region26: #{tpu_custom_call.1} parent=1 // pred_check
      _
    $region27: #{tpu_custom_call.1} parent=1 // pred_check_branch
      %138 = sbr.rel (0) target = $region29
    $region28: #{tpu_custom_call.1} parent=1 // pred_region
      %s140 = ssub.s32 128, 128
      %141 = vsyncadd [#allocation5], %s140
      %s143 = sshll.u32 [#allocation8], 4
      %s144 = int_to_ptr.vmem [resolvable:$true] %s143
      %146 = dma.vmem_to_hbm [thread:$0]  %s144, 128, %s2, [#allocation5]
    $region29: #{tpu_custom_call.1} parent=1 // pred_fallthru
      _
    // Predicated region
    $region30: #{tpu_custom_call.1} parent=1 // pred_check
      _
    $region31: #{tpu_custom_call.1} parent=1 // pred_check_branch
      %148 = sbr.rel (0) target = $region33
    $region32: #{tpu_custom_call.1} parent=1 // pred_region
      %149 = dma.done [#allocation5], 128
    $region33: #{tpu_custom_call.1} parent=1 // pred_fallthru
      _
    %150 = vsyncpa [#allocation4], 1
    %151 = vsyncpa [#allocation7], 1
    %152 = vsyncpa [#allocation5], 1

</llo_original>
